<compile_context>
chip_gen: v5e
topology: v5e:2x2
jax: 0.10.0
libtpu: 0.0.40
codegen_flags: <defaults>
</compile_context>

<pallas_src>
import numpy as np
import jax
import jax.numpy as jnp
from jax.experimental import pallas as pl
from jax.experimental.pallas import tpu as pltpu

_LANES = 128   # vreg lane width; last dim of every block
_P = 8         # params per node

# params layout (f32[_P] per node):
#   [0] asc_b1  (=  x_current)            [4] desc_b1  (= -x_current)
#   [1] asc_w2  (= -1/(x_cur - x_prev))   [5] desc_w2  (= -1/(x_later - x_cur))
#   [2] asc_b3  (0 or -0.5)               [6] desc_b3  (0 or -0.5)
#   [3] u_asc   (= u if prev else 0)      [7] u_desc   (= u if later else 0)


def _node_shape_kernel(params_ref, x_ref, out_ref):
    """Single node, one (tile_rows, 128) tile per grid step. Pure VPU."""
    x = x_ref[...]
    a1 = jnp.maximum(params_ref[0] - x, 0.0)                 # Linear(-1, x_cur) -> ReLU
    a2 = jnp.maximum(a1 * params_ref[1] + 1.0, 0.0)          # Linear(asc_w2, 1) -> ReLU
    d1 = jnp.maximum(x + params_ref[4], 0.0)                 # Linear( 1,-x_cur) -> ReLU
    d2 = jnp.maximum(d1 * params_ref[5] + 1.0, 0.0)          # Linear(desc_w2,1) -> ReLU
    # output_layer weight [[u, u]]; u_asc / u_desc already encode branch gating
    out_ref[...] = (params_ref[3] * (a2 + params_ref[2])
                    + params_ref[7] * (d2 + params_ref[6]))


def _node_shape_batched_kernel(params_ref, x_ref, out_ref):
    """Many nodes over the same dom tile (dom read from HBM once per tile)."""
    x = x_ref[...]
    n_nodes = out_ref.shape[0]
    for n in range(n_nodes):  # n_nodes is small & static -> unrolled at trace time
        a1 = jnp.maximum(params_ref[n, 0] - x, 0.0)
        a2 = jnp.maximum(a1 * params_ref[n, 1] + 1.0, 0.0)
        d1 = jnp.maximum(x + params_ref[n, 4], 0.0)
        d2 = jnp.maximum(d1 * params_ref[n, 5] + 1.0, 0.0)
        out_ref[n] = (params_ref[n, 3] * (a2 + params_ref[n, 2])
                      + params_ref[n, 7] * (d2 + params_ref[n, 6]))


def make_node_shape_params(x_previous, x_current, x_later, u_i):
    """Deterministic construction of the frozen-layer constants (module __init__)."""
    has_asc = x_previous is not None
    has_desc = x_later is not None
    p = np.zeros((_P,), dtype=np.float64)  # slopes in f64 before the f32 cast
    if has_asc:
        p[0] = x_current
        p[1] = -1.0 / (np.float64(x_current) - np.float64(x_previous))
        p[2] = -0.5 if has_desc else 0.0
        p[3] = u_i
    if has_desc:
        p[4] = -np.float64(x_current)
        p[5] = -1.0 / (np.float64(x_later) - np.float64(x_current))
        p[6] = -0.5 if has_asc else 0.0
        p[7] = u_i
    return jnp.asarray(p.astype(np.float32))


def _pad_lane_dense(dom, tile_rows):
    """(N, 1) -> (rows_padded, 128) lane-dense 2D slab + chosen tile rows."""
    n = dom.shape[0]
    flat = dom.reshape(-1)
    rows = pl.cdiv(max(n, 1), _LANES)
    # block rows: multiple of 8, at most `tile_rows`, no bigger than needed
    tr = max(8, min((int(tile_rows) // 8) * 8, ((rows + 7) // 8) * 8))
    rows_padded = pl.cdiv(rows, tr) * tr
    pad = rows_padded * _LANES - n
    if pad:
        flat = jnp.pad(flat, (0, pad))
    return flat.reshape(rows_padded, _LANES), tr, rows_padded


def node_shape_forward(dom, params, *, tile_rows=512):
    """dom: (N, 1) f32, params: f32[8] -> (N, 1) f32."""
    n = dom.shape[0]
    x2d, tr, rows_padded = _pad_lane_dense(dom, tile_rows)
    n_elems = rows_padded * _LANES
    out2d = pl.pallas_call(
        _node_shape_kernel,
        out_shape=jax.ShapeDtypeStruct((rows_padded, _LANES), dom.dtype),
        grid=(rows_padded // tr,),
        in_specs=[
            pl.BlockSpec(memory_space=pltpu.MemorySpace.SMEM),     # params (whole, SMEM)
            pl.BlockSpec((tr, _LANES), lambda i: (i, 0)),          # dom tile
        ],
        out_specs=pl.BlockSpec((tr, _LANES), lambda i: (i, 0)),
        compiler_params=pltpu.CompilerParams(dimension_semantics=("parallel",)),
        cost_estimate=pl.CostEstimate(flops=10 * n_elems, transcendentals=0,
                                      bytes_accessed=8 * n_elems),
    )(params, x2d)
    return out2d.reshape(-1)[:n].reshape(n, 1)


def node_shape_forward_batched(dom, params_all, *, tile_rows=512):
    """dom: (N, 1) f32, params_all: f32[n_nodes, 8] -> (n_nodes, N, 1) f32.

    One pallas_call for all FEM nodes: dom is DMA'd from HBM once per tile.
    """
    n = dom.shape[0]
    n_nodes = params_all.shape[0]
    x2d, tr, rows_padded = _pad_lane_dense(dom, tile_rows)
    n_elems = rows_padded * _LANES
    out = pl.pallas_call(
        _node_shape_batched_kernel,
        out_shape=jax.ShapeDtypeStruct((n_nodes, rows_padded, _LANES), dom.dtype),
        grid=(rows_padded // tr,),
        in_specs=[
            pl.BlockSpec(memory_space=pltpu.MemorySpace.SMEM),          # params table
            pl.BlockSpec((tr, _LANES), lambda i: (i, 0)),               # dom tile
        ],
        out_specs=pl.BlockSpec((n_nodes, tr, _LANES), lambda i: (0, i, 0)),
        compiler_params=pltpu.CompilerParams(dimension_semantics=("parallel",)),
        cost_estimate=pl.CostEstimate(flops=10 * n_nodes * n_elems, transcendentals=0,
                                      bytes_accessed=4 * n_elems + 4 * n_nodes * n_elems),
    )(params_all, x2d)
    return out.reshape(n_nodes, -1)[:, :n].reshape(n_nodes, n, 1)


def node_shape_reference(dom, x_previous, x_current, x_later, u_i):
    """Pure-numpy reference of the PyTorch forward (float32)."""
    x = np.asarray(dom, dtype=np.float32)
    if x_previous is not None:
        a = np.maximum(np.float32(x_current) - x, np.float32(0.0))
        a = np.maximum(a * np.float32(-1.0 / (x_current - x_previous)) + np.float32(1.0),
                       np.float32(0.0))
        a = a + (np.float32(-0.5) if x_later is not None else np.float32(0.0))
    else:
        a = np.zeros_like(x)
    if x_later is not None:
        d = np.maximum(x - np.float32(x_current), np.float32(0.0))
        d = np.maximum(d * np.float32(-1.0 / (x_later - x_current)) + np.float32(1.0),
                       np.float32(0.0))
        d = d + (np.float32(-0.5) if x_previous is not None else np.float32(0.0))
    else:
        d = np.zeros_like(x)
    return np.float32(u_i) * a + np.float32(u_i) * d


if __name__ == "__main__":
    key = jax.random.PRNGKey(0)
    N = 3000  # not a multiple of 128: exercises padding + lane-dense reshape
    dom = jax.random.uniform(key, (N, 1), dtype=jnp.float32)
    dom_np = np.asarray(dom)

    # 1) interior node; small tile_rows forces a multi-step grid (pipelined path)
    p_int = make_node_shape_params(0.0, 0.5, 1.0, 2.0)
    out = jax.block_until_ready(node_shape_forward(dom, p_int, tile_rows=8))
    ref = node_shape_reference(dom_np, 0.0, 0.5, 1.0, 2.0)
    assert out.shape == (N, 1)
    assert np.allclose(np.asarray(out), ref, rtol=1e-5, atol=1e-6)

    # 2) left boundary node (no previous neighbor): ascending branch disabled
    p_left = make_node_shape_params(None, 0.0, 0.5, 3.0)
    out_l = jax.block_until_ready(node_shape_forward(dom, p_left))
    ref_l = node_shape_reference(dom_np, None, 0.0, 0.5, 3.0)
    assert np.allclose(np.asarray(out_l), ref_l, rtol=1e-5, atol=1e-6)

    # 3) right boundary node (no later neighbor): descending branch disabled
    p_right = make_node_shape_params(0.5, 1.0, None, -1.5)
    out_r = jax.block_until_ready(node_shape_forward(dom, p_right))
    ref_r = node_shape_reference(dom_np, 0.5, 1.0, None, -1.5)
    assert np.allclose(np.asarray(out_r), ref_r, rtol=1e-5, atol=1e-6)

    # 4) batched: all nodes of a 3-node mesh in one kernel call
    node_cfgs = [(None, 0.0, 0.5, 1.5), (0.0, 0.5, 1.0, 2.0), (0.5, 1.0, None, -0.5)]
    params_all = jnp.stack([make_node_shape_params(*c) for c in node_cfgs])
    out_b = jax.block_until_ready(node_shape_forward_batched(dom, params_all))
    assert out_b.shape == (len(node_cfgs), N, 1)
    for i, cfg in enumerate(node_cfgs):
        ref_i = node_shape_reference(dom_np, *cfg)
        assert np.allclose(np.asarray(out_b[i]), ref_i, rtol=1e-5, atol=1e-6)

    print("KERNEL_OK")
</pallas_src>

<mosaic_0001>
module attributes {stable_mosaic.version = 11 : i64} {
  func.func @_node_shape_kernel(%arg0: i32, %arg1: memref<8xf32, #tpu.memory_space<smem>>, %arg2: memref<8x128xf32, #tpu.memory_space<vmem>>, %arg3: memref<8x128xf32, #tpu.memory_space<vmem>>) attributes {dimension_semantics = [#tpu.dimension_semantics<parallel>], iteration_bounds = array<i64: 3>, scalar_prefetch = 0 : i64, scratch_operands = 0 : i64, tpu.core_type = #tpu.core_type<tc>, window_params = [{transform_indices = @transform_0, window_bounds = array<i64: 8>}, {transform_indices = @transform_1, window_bounds = array<i64: 8, 128>}, {transform_indices = @transform_2, window_bounds = array<i64: 8, 128>}]} {
    %c0 = arith.constant 0 : index
    %c0_0 = arith.constant 0 : index
    %0 = vector.load %arg2[%c0, %c0_0] : memref<8x128xf32, #tpu.memory_space<vmem>>, vector<8x128xf32>
    %c0_1 = arith.constant 0 : index
    %1 = memref.load %arg1[%c0_1] : memref<8xf32, #tpu.memory_space<smem>>
    %2 = vector.broadcast %1 : f32 to vector<8x128xf32>
    %3 = arith.subf %2, %0 : vector<8x128xf32>
    %cst = arith.constant 0.000000e+00 : f32
    %4 = vector.broadcast %cst : f32 to vector<8x128xf32>
    %5 = arith.maximumf %3, %4 : vector<8x128xf32>
    %c1 = arith.constant 1 : index
    %6 = memref.load %arg1[%c1] : memref<8xf32, #tpu.memory_space<smem>>
    %7 = vector.broadcast %6 : f32 to vector<8x128xf32>
    %8 = arith.mulf %5, %7 : vector<8x128xf32>
    %cst_2 = arith.constant 1.000000e+00 : f32
    %9 = vector.broadcast %cst_2 : f32 to vector<8x128xf32>
    %10 = arith.addf %8, %9 : vector<8x128xf32>
    %cst_3 = arith.constant 0.000000e+00 : f32
    %11 = vector.broadcast %cst_3 : f32 to vector<8x128xf32>
    %12 = arith.maximumf %10, %11 : vector<8x128xf32>
    %c4 = arith.constant 4 : index
    %13 = memref.load %arg1[%c4] : memref<8xf32, #tpu.memory_space<smem>>
    %14 = vector.broadcast %13 : f32 to vector<8x128xf32>
    %15 = arith.addf %0, %14 : vector<8x128xf32>
    %cst_4 = arith.constant 0.000000e+00 : f32
    %16 = vector.broadcast %cst_4 : f32 to vector<8x128xf32>
    %17 = arith.maximumf %15, %16 : vector<8x128xf32>
    %c5 = arith.constant 5 : index
    %18 = memref.load %arg1[%c5] : memref<8xf32, #tpu.memory_space<smem>>
    %19 = vector.broadcast %18 : f32 to vector<8x128xf32>
    %20 = arith.mulf %17, %19 : vector<8x128xf32>
    %cst_5 = arith.constant 1.000000e+00 : f32
    %21 = vector.broadcast %cst_5 : f32 to vector<8x128xf32>
    %22 = arith.addf %20, %21 : vector<8x128xf32>
    %cst_6 = arith.constant 0.000000e+00 : f32
    %23 = vector.broadcast %cst_6 : f32 to vector<8x128xf32>
    %24 = arith.maximumf %22, %23 : vector<8x128xf32>
    %c3 = arith.constant 3 : index
    %25 = memref.load %arg1[%c3] : memref<8xf32, #tpu.memory_space<smem>>
    %c2 = arith.constant 2 : index
    %26 = memref.load %arg1[%c2] : memref<8xf32, #tpu.memory_space<smem>>
    %27 = vector.broadcast %26 : f32 to vector<8x128xf32>
    %28 = arith.addf %12, %27 : vector<8x128xf32>
    %29 = vector.broadcast %25 : f32 to vector<8x128xf32>
    %30 = arith.mulf %29, %28 : vector<8x128xf32>
    %c7 = arith.constant 7 : index
    %31 = memref.load %arg1[%c7] : memref<8xf32, #tpu.memory_space<smem>>
    %c6 = arith.constant 6 : index
    %32 = memref.load %arg1[%c6] : memref<8xf32, #tpu.memory_space<smem>>
    %33 = vector.broadcast %32 : f32 to vector<8x128xf32>
    %34 = arith.addf %24, %33 : vector<8x128xf32>
    %35 = vector.broadcast %31 : f32 to vector<8x128xf32>
    %36 = arith.mulf %35, %34 : vector<8x128xf32>
    %37 = arith.addf %30, %36 : vector<8x128xf32>
    %c0_7 = arith.constant 0 : index
    %c0_8 = arith.constant 0 : index
    %38 = vector.load %arg3[%c0_7, %c0_8] : memref<8x128xf32, #tpu.memory_space<vmem>>, vector<8x128xf32>
    tpu.vector_store %arg3[%c0_7, %c0_8], %37 {strides = array<i32>} : memref<8x128xf32, #tpu.memory_space<vmem>>, vector<8x128xf32>,
    return
  }
  func.func @transform_0(%arg0: i32) -> i32 {
    %c0_i32 = arith.constant 0 : i32
    %c0_i32_0 = arith.constant 0 : i32
    return %c0_i32 : i32
  }
  func.func @transform_1(%arg0: i32) -> (i32, i32) {
    %c0_i32 = arith.constant 0 : i32
    %c0_i32_0 = arith.constant 0 : i32
    return %arg0, %c0_i32 : i32, i32
  }
  func.func @transform_2(%arg0: i32) -> (i32, i32) {
    %c0_i32 = arith.constant 0 : i32
    %c0_i32_0 = arith.constant 0 : i32
    return %arg0, %c0_i32 : i32, i32
  }
}

</mosaic_0001>

<llo_original>
// kernel: tpu_custom_call.1
$region0: #{tpu_custom_call.1}
  #allocation0 [shape = 'u32[]', space=smem, size = 0x4, offset = 0x4, fixed_abs, tag = 'smem constant byte address 0x4 - core index']
  #allocation1 [shape = 'u32[72,128]{1,0:T(1,128)}', space=vmem, size = 0x9000, scoped, tag = 'internal scratch']
  %s0 = inlined_call_operand.hbm [shape: f32[8], index: 0, kind: input, shape index: {}]
  %s1 = inlined_call_operand.hbm [shape: f32[24,128], index: 1, kind: input, shape index: {}]
  %s2 = inlined_call_operand.hbm [shape: f32[24,128], index: 2, kind: output, shape index: {}]
  %s3 = sld [smem:[#allocation0]]
  $region49: #{tpu_custom_call.1} parent=0
    _
  %s5 = ssub.s32 1, %s3
  %s6 = scalar_select 0, %s5, %s3
  $region1: #{tpu_custom_call.1} parent=0
    #allocation2 [shape = 'u8[512]{0}', space=smem, size = 0x200, scoped, tag = 'input window, operand 0, single buffered']
    #allocation3 [shape = 's32[2]{0}', space=sflag, size = 0x8, scoped, tag = 'scoped memory for tpu_custom_call.1']
    #allocation4 [shape = 's32[2]{0}', space=sflag, size = 0x8, scoped, tag = 'scoped memory for tpu_custom_call.1']
    #allocation5 [shape = 's32[2]{0}', space=sflag, size = 0x8, scoped, tag = 'scoped memory for tpu_custom_call.1']
    #allocation6 [shape = 'u8[8192]{0}', space=vmem, size = 0x2000, scoped, tag = 'input window, operand 1']
    #allocation7 [shape = 'u8[8192]{0}', space=vmem, size = 0x2000, scoped, tag = 'output window, operand 0']
    %7 = vsyncpa [#allocation5], 0
    %8 = vsyncpa [#allocation3], 0
    %s9 = scalar_lea.sflag [#allocation3], 1
    %10 = vsyncpa %s9, 0
    %11 = vsyncpa [#allocation4], 0
    %s12 = scalar_lea.sflag [#allocation4], 1
    %13 = vsyncpa %s12, 0
    loop: start=0, step=1, limit=5
    $region2: #{tpu_custom_call.1} parent=1 // loop_pre_header
      _
    $region3: #{tpu_custom_call.1} parent=1 // loop_header
      %s15 = sphi 0, %s19
      %p16 = scmp.ge.s32.totalorder %s15, 5
      %s23 = sphi 0, %s23
      %s25 = sphi 0, %s23
      %s26 = sphi 0, %s25
      %s40 = sphi 0, %s26
      %s46 = sphi 0, %s48
      %s49 = sphi 0, %s46
      %s50 = sphi 0, %s49
      %s66 = sphi 0, %s50
      %s72 = sphi 0, %s74
      %s75 = sphi 0, %s72
      %s76 = sphi 0, %s75
      %s92 = sphi 0, %s76
    $region4: #{tpu_custom_call.1} parent=1 // loop_header_branch
      %18 = sbr.rel (%p16) target = $region8
    $region5: #{tpu_custom_call.1} parent=1 // loop_body
      %s20 = ssub.s32 %s15, 1
      %s21 = ssub.s32 %s15, 2
      %s22 = sadd.s32 %s15, 1
      %s24 = sadd.s32 %s23, 1
      %p27 = scmp.eq.s32.totalorder %s15, 2
      %p28 = scmp.ne.s32.totalorder %s23, %s25
      %p29 = scmp.eq.s32.totalorder %s15, 0
      %p30 = por %p28, %p29
      %p31 = scmp.ne.s32.totalorder %s23, %s25
      %p32 = scmp.eq.s32.totalorder %s20, 2
      %p33 = por %p31, %p32
      %p34 = scmp.ne.s32.totalorder %s25, %s26
      %p35 = scmp.eq.s32.totalorder %s20, 0
      %p36 = por %p34, %p35
      %p37 = scmp.ne.s32.totalorder %s25, %s26
      %p38 = scmp.eq.s32.totalorder %s21, 2
      %p39 = por %p37, %p38
      %p41 = scmp.ne.s32.totalorder %s26, %s40
      %p42 = scmp.eq.s32.totalorder %s21, 0
      %p43 = por %p41, %p42
      %s44 = ssub.s32 %s15, %s22
      %p45 = scmp.eq.s32.totalorder %s44, 0
      %s47 = sadd.s32 %s46, 1
      %s48 = scalar_select %p45, %s46, %s47
      %p51 = pneg %p45
      %p52 = scmp.eq.s32.totalorder %s15, 2
      %p53 = por %p51, %p52
      %p54 = scmp.ne.s32.totalorder %s46, %s49
      %p55 = scmp.eq.s32.totalorder %s15, 0
      %p56 = por %p54, %p55
      %p57 = scmp.ne.s32.totalorder %s46, %s49
      %p58 = scmp.eq.s32.totalorder %s20, 2
      %p59 = por %p57, %p58
      %p60 = scmp.ne.s32.totalorder %s49, %s50
      %p61 = scmp.eq.s32.totalorder %s20, 0
      %p62 = por %p60, %p61
      %p63 = scmp.ne.s32.totalorder %s49, %s50
      %p64 = scmp.eq.s32.totalorder %s21, 2
      %p65 = por %p63, %p64
      %p67 = scmp.ne.s32.totalorder %s50, %s66
      %p68 = scmp.eq.s32.totalorder %s21, 0
      %p69 = por %p67, %p68
      %s70 = ssub.s32 %s15, %s22
      %p71 = scmp.eq.s32.totalorder %s70, 0
      %s73 = sadd.s32 %s72, 1
      %s74 = scalar_select %p71, %s72, %s73
      %p77 = pneg %p71
      %p78 = scmp.eq.s32.totalorder %s15, 2
      %p79 = por %p77, %p78
      %p80 = scmp.ne.s32.totalorder %s72, %s75
      %p81 = scmp.eq.s32.totalorder %s15, 0
      %p82 = por %p80, %p81
      %p83 = scmp.ne.s32.totalorder %s72, %s75
      %p84 = scmp.eq.s32.totalorder %s20, 2
      %p85 = por %p83, %p84
      %p86 = scmp.ne.s32.totalorder %s75, %s76
      %p87 = scmp.eq.s32.totalorder %s20, 0
      %p88 = por %p86, %p87
      %p89 = scmp.ne.s32.totalorder %s75, %s76
      %p90 = scmp.eq.s32.totalorder %s21, 2
      %p91 = por %p89, %p90
      %p93 = scmp.ne.s32.totalorder %s76, %s92
      %p94 = scmp.eq.s32.totalorder %s21, 0
      %p95 = por %p93, %p94
      %p96 = scmp.le.s32.totalorder 1, %s15
      %p97 = scmp.lt.s32.totalorder %s15, 4
      %p98 = pnand %p96, %p97
      %p99 = pneg %p98
      // Predicated region
      $region9: #{tpu_custom_call.1} parent=5 // pred_check
        _
      $region10: #{tpu_custom_call.1} parent=5 // pred_check_branch
        %101 = sbr.rel (%p98) target = $region12
      $region11: #{tpu_custom_call.1} parent=5 // pred_region
        %s102 = ssub.s32 %s15, 1
        // Predicated region
        $region13: #{tpu_custom_call.1} parent=11 // pred_check
          %p103 = pneg %p36
        $region14: #{tpu_custom_call.1} parent=11 // pred_check_branch
          %105 = sbr.rel (%p103) target = $region16
        $region15: #{tpu_custom_call.1} parent=11 // pred_region
          %107 = vsyncadd [#allocation5], 0
          %s109 = sshll.u32 %s0, 4
          %s110 = int_to_ptr.hbm [resolvable:$true] %s109
          %112 = dma.hbm_to_smem %s110, 16, [#allocation2], [#allocation5]
        $region16: #{tpu_custom_call.1} parent=11 // pred_fallthru
          _
      $region12: #{tpu_custom_call.1} parent=5 // pred_fallthru
        _
      %p113 = scmp.lt.s32.totalorder %s15, 3
      // Predicated region
      $region17: #{tpu_custom_call.1} parent=5 // pred_check
        %p114 = pneg %p113
      $region18: #{tpu_custom_call.1} parent=5 // pred_check_branch
        %116 = sbr.rel (%p114) target = $region20
      $region19: #{tpu_custom_call.1} parent=5 // pred_region
        // Predicated region
        $region21: #{tpu_custom_call.1} parent=19 // pred_check
          %p117 = pneg %p56
        $region22: #{tpu_custom_call.1} parent=19 // pred_check_branch
          %119 = sbr.rel (%p117) target = $region24
        $region23: #{tpu_custom_call.1} parent=19 // pred_region
          %s120 = sand.u32 %s46, 1
          %s121 = scalar_lea.sflag [#allocation3], %s120
          %s122 = sand.u32 %s46, 1
          %s123 = smul.addr %s122, 8
          %s124 = scalar_lea.vmem [#allocation6], %s123
          %126 = vsyncadd %s121, 0
          %s127 = smul.addr %s15, 8
          %s128 = scalar_lea.hbm %s1, %s127
          %s130 = sshll.u32 %s128, 4
          %s131 = int_to_ptr.hbm [resolvable:$true] %s130
          %s132 = sshll.u32 %s124, 4
          %s133 = int_to_ptr.vmem [resolvable:$true] %s132
          %135 = dma.hbm_to_vmem [thread:$0]  %s131, 128, %s133, %s121
        $region24: #{tpu_custom_call.1} parent=19 // pred_fallthru
          _
      $region20: #{tpu_custom_call.1} parent=5 // pred_fallthru
        _
      %p136 = scmp.le.s32.totalorder 1, %s15
      %p137 = scmp.lt.s32.totalorder %s15, 4
      %p138 = pnand %p136, %p137
      %p139 = pneg %p138
      // Predicated region
      $region25: #{tpu_custom_call.1} parent=5 // pred_check
        _
      $region26: #{tpu_custom_call.1} parent=5 // pred_check_branch
        %141 = sbr.rel (%p138) target = $region28
      $region27: #{tpu_custom_call.1} parent=5 // pred_region
        %s142 = ssub.s32 %s15, 1
        // Predicated region
        $region29: #{tpu_custom_call.1} parent=27 // pred_check
          %p143 = pneg %p36
        $region30: #{tpu_custom_call.1} parent=27 // pred_check_branch
          %145 = sbr.rel (%p143) target = $region32
        $region31: #{tpu_custom_call.1} parent=27 // pred_region
          %147 = dma.done [#allocation5], 16
        $region32: #{tpu_custom_call.1} parent=27 // pred_fallthru
          _
        %s148 = sand.u32 %s49, 1
        %s149 = scalar_lea.sflag [#allocation3], %s148
        %s150 = sand.u32 %s49, 1
        %s151 = smul.addr %s150, 8
        %s152 = scalar_lea.vmem [#allocation6], %s151
        // Predicated region
        $region33: #{tpu_custom_call.1} parent=27 // pred_check
          %p153 = pneg %p62
        $region34: #{tpu_custom_call.1} parent=27 // pred_check_branch
          %155 = sbr.rel (%p153) target = $region36
        $region35: #{tpu_custom_call.1} parent=27 // pred_region
          %157 = dma.done %s149, 128
        $region36: #{tpu_custom_call.1} parent=27 // pred_fallthru
          _
        %158 = sfence
        %p159 = pneg %p36
        %p160 = pneg %p33
        %s161 = sand.u32 %s49, 1
        %s162 = scalar_lea.sflag [#allocation3], %s161
        %s163 = sand.u32 %s49, 1
        %s164 = smul.addr %s163, 8
        %s165 = scalar_lea.vmem [#allocation6], %s164
        %p166 = pneg %p62
        %p167 = pneg %p59
        %p168 = pneg %p88
        %p169 = pneg %p85
        %s170 = sand.u32 %s75, 1
        %s171 = scalar_lea.sflag [#allocation4], %s170
        %s172 = sand.u32 %s75, 1
        %s173 = smul.addr %s172, 8
        %s174 = scalar_lea.vmem [#allocation7], %s173
        %v175 = vld [vmem:[%s152] sm:$0xff]
        %s176 = sld [smem:[#allocation2]]
        %v177 = vstv %s176
        %v178 = vsub.f32 %v177, %v175
        %v179 = vmax.f32 %v178, 0.0
        %s180 = sld [smem:[#allocation2 + $0x1]]
        %v181 = vstv %s180
        %v182 = vmul.f32 %v179, %v181
        %v183 = vadd.f32 %v182, 1.0
        %v184 = vmax.f32 %v183, 0.0
        %s185 = sld [smem:[#allocation2 + $0x4]]
        %v186 = vstv %s185
        %v187 = vadd.f32 %v175, %v186
        %v188 = vmax.f32 %v187, 0.0
        %s189 = sld [smem:[#allocation2 + $0x5]]
        %v190 = vstv %s189
        %v191 = vmul.f32 %v188, %v190
        %v192 = vadd.f32 %v191, 1.0
        %v193 = vmax.f32 %v192, 0.0
        %s194 = sld [smem:[#allocation2 + $0x3]]
        %s195 = sld [smem:[#allocation2 + $0x2]]
        %v196 = vstv %s195
        %v197 = vadd.f32 %v184, %v196
        %v198 = vstv %s194
        %v199 = vmul.f32 %v198, %v197
        %s200 = sld [smem:[#allocation2 + $0x7]]
        %s201 = sld [smem:[#allocation2 + $0x6]]
        %v202 = vstv %s201
        %v203 = vadd.f32 %v193, %v202
        %v204 = vstv %s200
        %v205 = vmul.f32 %v204, %v203
        %v206 = vadd.f32 %v199, %v205
        %207 = vst [vmem:[%s174] sm:$0xff] %v206
        %s208 = sand.u32 %s75, 1
        %s209 = scalar_lea.sflag [#allocation4], %s208
        %s210 = sand.u32 %s75, 1
        %s211 = smul.addr %s210, 8
        %s212 = scalar_lea.vmem [#allocation7], %s211
        // Predicated region
        $region37: #{tpu_custom_call.1} parent=27 // pred_check
          %p213 = pneg %p85
        $region38: #{tpu_custom_call.1} parent=27 // pred_check_branch
          %215 = sbr.rel (%p213) target = $region40
        $region39: #{tpu_custom_call.1} parent=27 // pred_region
          %217 = vsyncadd %s209, 0
          %s218 = smul.addr %s20, 8
          %s219 = scalar_lea.hbm %s2, %s218
          %s221 = sshll.u32 %s212, 4
          %s222 = int_to_ptr.vmem [resolvable:$true] %s221
          %s223 = sshll.u32 %s219, 4
          %s224 = int_to_ptr.hbm [resolvable:$true] %s223
          %226 = dma.vmem_to_hbm [thread:$0]  %s222, 128, %s224, %s209
        $region40: #{tpu_custom_call.1} parent=27 // pred_fallthru
          _
      $region28: #{tpu_custom_call.1} parent=5 // pred_fallthru
        _
      %p227 = scmp.le.s32.totalorder 2, %s15
      // Predicated region
      $region41: #{tpu_custom_call.1} parent=5 // pred_check
        %p228 = pneg %p227
      $region42: #{tpu_custom_call.1} parent=5 // pred_check_branch
        %230 = sbr.rel (%p228) target = $region44
      $region43: #{tpu_custom_call.1} parent=5 // pred_region
        %s231 = ssub.s32 %s15, 2
        // Predicated region
        $region45: #{tpu_custom_call.1} parent=43 // pred_check
          %p232 = pneg %p91
        $region46: #{tpu_custom_call.1} parent=43 // pred_check_branch
          %234 = sbr.rel (%p232) target = $region48
        $region47: #{tpu_custom_call.1} parent=43 // pred_region
          %s235 = sand.u32 %s76, 1
          %s236 = scalar_lea.sflag [#allocation4], %s235
          %s237 = sand.u32 %s76, 1
          %s238 = smul.addr %s237, 8
          %s239 = scalar_lea.vmem [#allocation7], %s238
          %241 = dma.done %s236, 128
        $region48: #{tpu_custom_call.1} parent=43 // pred_fallthru
          _
      $region44: #{tpu_custom_call.1} parent=5 // pred_fallthru
        _
    $region6: #{tpu_custom_call.1} parent=1 // loop_footer
      %s19 = sadd.s32 1, %s15
    $region7: #{tpu_custom_call.1} parent=1 // loop_footer_branch
      %14 = sbr.rel target = $region3
    $region8: #{tpu_custom_call.1} parent=1 // loop_exit
      _
    %242 = vsyncpa [#allocation3], 1
    %s243 = scalar_lea.sflag [#allocation3], 1
    %244 = vsyncpa %s243, 1
    %245 = vsyncpa [#allocation4], 1
    %s246 = scalar_lea.sflag [#allocation4], 1
    %247 = vsyncpa %s246, 1
    %248 = vsyncpa [#allocation5], 1
    %s249 = scalar_lea.sflag [#allocation5], 1
    %250 = vsyncpa %s249, 1

</llo_original>
